<compile_context>
chip_gen: v7x
topology: tpu7x:2x2x1
jax: 0.10.0
libtpu: 0.0.40
codegen_flags: <defaults>
</compile_context>

<pallas_src>
import functools

import jax
import jax.numpy as jnp
from jax.experimental import pallas as pl
from jax.experimental.pallas import tpu as pltpu


def _round_up(x, m):
    return ((x + m - 1) // m) * m


def _pick_tile(dim, target, granule):
    """Largest multiple of `granule` <= target that divides dim (dim is a multiple of granule)."""
    if dim <= target:
        return dim
    t = (target // granule) * granule
    while t >= granule:
        if dim % t == 0:
            return t
        t -= granule
    return dim


@functools.lru_cache(maxsize=1)
def _vmem_limit_bytes():
    """Generation-aware VMEM limit: ~3/4 of physical VMEM, capped at 96 MiB."""
    cap = 64 * 1024 * 1024  # conservative fallback (v7x-sized)
    try:
        info = pltpu.get_tpu_info()
        cap = int(getattr(info, "vmem_capacity_bytes", cap))
    except Exception:
        pass
    return int(min(cap * 3 // 4, 96 * 1024 * 1024))


def _split_linear_kernel(idx_ref, x_ref, w_ref, b_ref, o_ref, *, tk):
    # idx_ref (scalar prefetch) already drove the weight/bias index_maps; unused here.
    del idx_ref
    k = pl.program_id(1)

    @pl.when(k == 0)
    def _init():
        o_ref[...] = jnp.zeros_like(o_ref)

    # x is fully resident in VMEM; slice the K slab for this step (aligned to 128).
    start = pl.multiple_of(k * tk, 128)
    xs = x_ref[:, pl.ds(start, tk)]

    # Pure MXU work in the inner K loop: bf16 x bf16 -> f32, accumulated into the
    # resident f32 output block (its index is k-invariant, so no writeback per step).
    o_ref[...] += jnp.dot(xs, w_ref[...], preferred_element_type=jnp.float32)

    @pl.when(k == pl.num_programs(1) - 1)
    def _finalize():
        # Bias add once per output tile, in f32 (safe on v5e: no bf16 VPU needed).
        o_ref[...] += b_ref[...].astype(jnp.float32)


def prepare_split_linear_params(weights_stacked, biases_stacked,
                                param_dtype=jnp.bfloat16):
    """One-time parameter prep (NOT in the per-forward path).

    weights_stacked: (S, O, K) f32  ->  (S, Kp, Op) param_dtype, pre-transposed and
                                         zero-padded so Kp, Op are multiples of 128.
    biases_stacked : (S, O)    f32  ->  (S, 1, Op) f32 (epilogue stays f32).
    """
    S, O, K = weights_stacked.shape
    Kp, Op = _round_up(K, 128), _round_up(O, 128)
    wt = jnp.transpose(weights_stacked, (0, 2, 1)).astype(param_dtype)      # (S, K, O)
    wt = jnp.pad(wt, ((0, 0), (0, Kp - K), (0, Op - O)))
    b2 = biases_stacked.reshape(S, 1, O).astype(jnp.float32)
    b2 = jnp.pad(b2, ((0, 0), (0, 0), (0, Op - O)))
    return wt, b2


@functools.partial(jax.jit, static_argnames=("out_features", "tile_n", "tile_k"))
def split_linear(x, wt, b2, split_idx, *, out_features=None, tile_n=2048, tile_k=2048):
    """x: (B, K) f32; wt: (S, Kp, Op) pre-transposed; b2: (S, 1, Op); split_idx scalar."""
    B, K = x.shape
    S, Kp, Op = wt.shape
    assert b2.shape == (S, 1, Op)
    assert Kp >= K

    # Pad activations along K to match the padded weights (zero rows -> no effect).
    if Kp != K:
        x = jnp.pad(x, ((0, 0), (0, Kp - K)))

    tk = _pick_tile(Kp, tile_k, 128)
    tn = _pick_tile(Op, tile_n, 128)
    grid = (Op // tn, Kp // tk)

    # Cast activations once so the MXU sees a native bf16 x bf16 matmul.
    x_c = x.astype(wt.dtype)

    # Clamp split index -> never an out-of-bounds weight DMA.
    idx = jnp.clip(jnp.asarray(split_idx, jnp.int32), 0, S - 1).reshape(1)

    grid_spec = pltpu.PrefetchScalarGridSpec(
        num_scalar_prefetch=1,
        grid=grid,
        in_specs=[
            # x: full (B, Kp) block, index never changes -> fetched once, stays resident.
            pl.BlockSpec((B, Kp), lambda n, k, idx_ref: (0, 0)),
            # Selected split's weight tile (split chosen via scalar prefetch).
            pl.BlockSpec((pl.Squeezed(), tk, tn),
                         lambda n, k, idx_ref: (idx_ref[0], k, n)),
            # Selected split's bias tile.
            pl.BlockSpec((pl.Squeezed(), 1, tn),
                         lambda n, k, idx_ref: (idx_ref[0], 0, n)),
        ],
        # Output block independent of k -> resident f32 accumulator across the K loop.
        out_specs=pl.BlockSpec((B, tn), lambda n, k, idx_ref: (0, n)),
    )

    cost = pl.CostEstimate(
        flops=2 * B * Kp * Op,
        transcendentals=0,
        bytes_accessed=(B * Kp * x_c.dtype.itemsize      # x fetched once
                        + Kp * Op * wt.dtype.itemsize    # one split's weights
                        + Op * 4                         # bias
                        + B * Op * 4),                   # f32 output
    )

    out = pl.pallas_call(
        functools.partial(_split_linear_kernel, tk=tk),
        out_shape=jax.ShapeDtypeStruct((B, Op), jnp.float32),
        grid_spec=grid_spec,
        compiler_params=pltpu.CompilerParams(
            # N axis parallel (v7x 2-TC sharding; harmless on v5e/v6e), K arbitrary.
            dimension_semantics=("parallel", "arbitrary"),
            vmem_limit_bytes=_vmem_limit_bytes(),
        ),
        cost_estimate=cost,
    )(idx, x_c, wt, b2)

    # Strip the output padding, if any.
    if out_features is not None and out_features != Op:
        out = out[:, :out_features]
    return out


if __name__ == "__main__":
    # Small shapes consistent with the module.
    batch = 8
    in_features = 128
    out_features = 256
    num_splits = 2
    out_part = out_features // num_splits  # 128

    key = jax.random.PRNGKey(0)
    kx, kw, kb = jax.random.split(key, 3)

    # Deterministic "randn"-style params in the PyTorch layout: (S, O_part, K), (S, O_part).
    x = jax.random.normal(kx, (batch, in_features), dtype=jnp.float32)
    weights = jax.random.normal(kw, (num_splits, out_part, in_features), dtype=jnp.float32)
    biases = jax.random.normal(kb, (num_splits, out_part), dtype=jnp.float32)

    # One-time prep (pre-transpose + pad + bf16 cast) -- NOT in the per-call path.
    wt, b2 = prepare_split_linear_params(weights, biases)

    for split_idx in (0, 1):
        out = split_linear(x, wt, b2, split_idx, out_features=out_part)
        out = jax.block_until_ready(out)
        assert out.shape == (batch, out_part)

        # Tight check against a reference using the same bf16 weight/activation quantization.
        x_b = x.astype(jnp.bfloat16).astype(jnp.float32)
        w_b = weights[split_idx].astype(jnp.bfloat16).astype(jnp.float32)
        ref_bf16 = x_b @ w_b.T + biases[split_idx]
        assert jnp.allclose(out, ref_bf16, atol=5e-2, rtol=5e-2)

        # Loose check against the pure-f32 PyTorch-style reference (bf16 weight error budget).
        ref_f32 = x @ weights[split_idx].T + biases[split_idx]
        assert jnp.allclose(out, ref_f32, atol=5e-1, rtol=5e-2)

    print("KERNEL_OK")
</pallas_src>

<mosaic_0001>
module attributes {stable_mosaic.version = 11 : i64} {
  func.func @_split_linear_kernel(%arg0: i32, %arg1: i32, %arg2: memref<1xi32, #tpu.memory_space<smem>>, %arg3: memref<8x128xbf16, #tpu.memory_space<vmem>>, %arg4: memref<1x128x128xbf16, #tpu.memory_space<vmem>>, %arg5: memref<1x1x128xf32, #tpu.memory_space<vmem>>, %arg6: memref<8x128xf32, #tpu.memory_space<vmem>>) attributes {dimension_semantics = [#tpu.dimension_semantics<parallel>, #tpu.dimension_semantics<arbitrary>], iteration_bounds = array<i64: 1, 1>, scalar_prefetch = 1 : i64, scratch_operands = 0 : i64, tpu.core_type = #tpu.core_type<tc>, window_params = [{pipeline_mode = #tpu.pipeline_mode<synchronous>, transform_indices = @transform_0, window_bounds = array<i64: 8, 128>}, {transform_indices = @transform_1, window_bounds = array<i64: 1, 128, 128>}, {transform_indices = @transform_2, window_bounds = array<i64: 1, 1, 128>}, {transform_indices = @transform_3, window_bounds = array<i64: 8, 128>}]} {
    %c0_i32 = arith.constant 0 : i32
    %0 = arith.cmpi eq, %arg1, %c0_i32 : i32
    %1 = arith.extui %0 : i1 to i32
    %c0_i32_0 = arith.constant 0 : i32
    %2 = arith.cmpi ne, %1, %c0_i32_0 : i32
    scf.if %2 {
      %cst_10 = arith.constant 0.000000e+00 : f32
      %16 = vector.broadcast %cst_10 : f32 to vector<8x128xf32>
      %c0_11 = arith.constant 0 : index
      %c0_12 = arith.constant 0 : index
      %17 = vector.load %arg6[%c0_11, %c0_12] : memref<8x128xf32, #tpu.memory_space<vmem>>, vector<8x128xf32>
      tpu.vector_store %arg6[%c0_11, %c0_12], %16 {strides = array<i32>} : memref<8x128xf32, #tpu.memory_space<vmem>>, vector<8x128xf32>,
    } else {
    }
    %c128_i32 = arith.constant 128 : i32
    %3 = arith.muli %arg1, %c128_i32 : i32
    %4 = tpu.assume_multiple %3, 128 : i32
    %c0 = arith.constant 0 : index
    %5 = arith.index_cast %4 : i32 to index
    %6 = vector.load %arg3[%c0, %5] : memref<8x128xbf16, #tpu.memory_space<vmem>>, vector<8x128xbf16>
    %c0_1 = arith.constant 0 : index
    %c0_2 = arith.constant 0 : index
    %7 = vector.load %arg6[%c0_1, %c0_2] : memref<8x128xf32, #tpu.memory_space<vmem>>, vector<8x128xf32>
    %c0_3 = arith.constant 0 : index
    %c0_4 = arith.constant 0 : index
    %c0_5 = arith.constant 0 : index
    %8 = vector.load %arg4[%c0_3, %c0_4, %c0_5] : memref<1x128x128xbf16, #tpu.memory_space<vmem>>, vector<1x128x128xbf16>
    %9 = vector.shape_cast %8 : vector<1x128x128xbf16> to vector<128x128xbf16>
    %cst = arith.constant dense<0.000000e+00> : vector<8x128xf32>
    %10 = tpu.matmul %6, %9, %cst {dimension_numbers = #tpu.dot_dimension_numbers<[1], [0], [0], [1], [0, 0, 1, 1], [], []>} : vector<8x128xbf16>, vector<128x128xbf16>, vector<8x128xf32> -> vector<8x128xf32>
    %11 = arith.addf %7, %10 : vector<8x128xf32>
    %c0_6 = arith.constant 0 : index
    %c0_7 = arith.constant 0 : index
    %12 = vector.load %arg6[%c0_6, %c0_7] : memref<8x128xf32, #tpu.memory_space<vmem>>, vector<8x128xf32>
    tpu.vector_store %arg6[%c0_6, %c0_7], %11 {strides = array<i32>} : memref<8x128xf32, #tpu.memory_space<vmem>>, vector<8x128xf32>,
    %c0_i32_8 = arith.constant 0 : i32
    %13 = arith.cmpi eq, %arg1, %c0_i32_8 : i32
    %14 = arith.extui %13 : i1 to i32
    %c0_i32_9 = arith.constant 0 : i32
    %15 = arith.cmpi ne, %14, %c0_i32_9 : i32
    scf.if %15 {
      %c0_10 = arith.constant 0 : index
      %c0_11 = arith.constant 0 : index
      %16 = vector.load %arg6[%c0_10, %c0_11] : memref<8x128xf32, #tpu.memory_space<vmem>>, vector<8x128xf32>
      %c0_12 = arith.constant 0 : index
      %c0_13 = arith.constant 0 : index
      %c0_14 = arith.constant 0 : index
      %17 = vector.load %arg5[%c0_12, %c0_13, %c0_14] : memref<1x1x128xf32, #tpu.memory_space<vmem>>, vector<1x1x128xf32>
      %18 = vector.shape_cast %17 : vector<1x1x128xf32> to vector<1x128xf32>
      %19 = vector.broadcast %18 : vector<1x128xf32> to vector<8x128xf32>
      %20 = arith.addf %16, %19 : vector<8x128xf32>
      %c0_15 = arith.constant 0 : index
      %c0_16 = arith.constant 0 : index
      %21 = vector.load %arg6[%c0_15, %c0_16] : memref<8x128xf32, #tpu.memory_space<vmem>>, vector<8x128xf32>
      tpu.vector_store %arg6[%c0_15, %c0_16], %20 {strides = array<i32>} : memref<8x128xf32, #tpu.memory_space<vmem>>, vector<8x128xf32>,
    } else {
    }
    return
  }
  func.func @transform_0(%arg0: i32, %arg1: i32, %arg2: memref<1xi32, #tpu.memory_space<smem>>) -> (i32, i32) {
    %c0_i32 = arith.constant 0 : i32
    %c0_i32_0 = arith.constant 0 : i32
    %c0_i32_1 = arith.constant 0 : i32
    return %c0_i32, %c0_i32_0 : i32, i32
  }
  func.func @transform_1(%arg0: i32, %arg1: i32, %arg2: memref<1xi32, #tpu.memory_space<smem>>) -> (i32, i32, i32) {
    %c0 = arith.constant 0 : index
    %0 = memref.load %arg2[%c0] : memref<1xi32, #tpu.memory_space<smem>>
    %c0_i32 = arith.constant 0 : i32
    return %0, %arg1, %arg0 : i32, i32, i32
  }
  func.func @transform_2(%arg0: i32, %arg1: i32, %arg2: memref<1xi32, #tpu.memory_space<smem>>) -> (i32, i32, i32) {
    %c0 = arith.constant 0 : index
    %0 = memref.load %arg2[%c0] : memref<1xi32, #tpu.memory_space<smem>>
    %c0_i32 = arith.constant 0 : i32
    %c0_i32_0 = arith.constant 0 : i32
    return %0, %c0_i32, %arg0 : i32, i32, i32
  }
  func.func @transform_3(%arg0: i32, %arg1: i32, %arg2: memref<1xi32, #tpu.memory_space<smem>>) -> (i32, i32) {
    %c0_i32 = arith.constant 0 : i32
    %c0_i32_0 = arith.constant 0 : i32
    return %c0_i32, %arg0 : i32, i32
  }
}

</mosaic_0001>

<llo_original>
// kernel: split_linear.1
$region0: #{split_linear.1}
  #allocation0 [shape = 'u32[]', space=smem, size = 0x4, offset = 0x4, fixed_abs, tag = 'smem constant byte address 0x4 - core index']
  #allocation1 [shape = 'u32[144,128]{1,0:T(1,128)}', space=vmem, size = 0x12000, scoped, tag = 'internal scratch']
  #allocation2 [shape = 's32[1]{0}', space=sflag, size = 0x4, scoped, tag = 'scoped memory for split_linear.1']
  #allocation3 [shape = 's32[1]{0:T(128)S(6)}', space=smem, size = 0x200, scoped, tag = 'prefetched SMEM operand 0']
  %s0 = inlined_call_operand.<no memory space> [shape: s32[1], index: 0, kind: input, shape index: {}]
  %s1 = inlined_call_operand.vmem [shape: bf16[8,128], index: 1, kind: input, shape index: {}]
  %s2 = inlined_call_operand.hbm [shape: bf16[2,128,128], index: 2, kind: input, shape index: {}]
  %s3 = inlined_call_operand.vmem [shape: f32[2,1,128], index: 3, kind: input, shape index: {}]
  %s4 = inlined_call_operand.hbm [shape: f32[8,128], index: 4, kind: output, shape index: {}]
  %s5 = sld [smem:[#allocation0]]
  $region34: #{split_linear.1} parent=0
    _
  %s7 = ssub.s32 1, %s5
  %s8 = scalar_select 0, %s7, %s5
  %9 = sst [smem:[#allocation3]] %s0
  $region1: #{split_linear.1} parent=0
    #allocation4 [shape = 'u8[32768]{0}', space=vmem, size = 0x8000, scoped, tag = 'input window, operand 2, single buffered']
    #allocation5 [shape = 's32[1]{0}', space=sflag, size = 0x4, scoped, tag = 'scoped memory for split_linear.1']
    #allocation6 [shape = 's32[1]{0}', space=sflag, size = 0x4, scoped, tag = 'scoped memory for split_linear.1']
    #allocation7 [shape = 'u8[4096]{0}', space=vmem, size = 0x1000, scoped, tag = 'output window, operand 0, single buffered']
    %10 = vsyncpa [#allocation5], 0
    %11 = vsyncpa [#allocation6], 0
    // Predicated region
    $region2: #{split_linear.1} parent=1 // pred_check
      _
    $region3: #{split_linear.1} parent=1 // pred_check_branch
      %13 = sbr.rel (0) target = $region5
    $region4: #{split_linear.1} parent=1 // pred_region
      _
    $region5: #{split_linear.1} parent=1 // pred_fallthru
      _
    // Predicated region
    $region6: #{split_linear.1} parent=1 // pred_check
      _
    $region7: #{split_linear.1} parent=1 // pred_check_branch
      %15 = sbr.rel (0) target = $region9
    $region8: #{split_linear.1} parent=1 // pred_region
      %s16 = sld [smem:[#allocation3]]
      %s18 = ssub.s32 1024, 1024
      %19 = vsyncadd [#allocation5], %s18
      %s20 = smul.addr %s16, 16
      %s21 = smul.addr %s20, 64
      %s22 = scalar_lea.hbm %s2, %s21
      %s23 = sshll.u32 [#allocation4], 4
      %s24 = int_to_ptr.vmem [resolvable:$true] %s23
      %29 = dma.hbm_to_vmem [thread:$0]  %s22, 1024, %s24, [#allocation5], 64, 64, 4
    $region9: #{split_linear.1} parent=1 // pred_fallthru
      _
    // Predicated region
    $region10: #{split_linear.1} parent=1 // pred_check
      _
    $region11: #{split_linear.1} parent=1 // pred_check_branch
      %31 = sbr.rel (0) target = $region13
    $region12: #{split_linear.1} parent=1 // pred_region
      %s32 = sld [smem:[#allocation3]]
      %p33 = scmp.lt.s32.totalorder %s32, 1
      %s34 = scalar_select %p33, %s32, 1
      %s35 = scalar_lea.vmem %s3, %s34
      %s36 = sld [smem:[#allocation3]]
    $region13: #{split_linear.1} parent=1 // pred_fallthru
      _
    // Predicated region
    $region14: #{split_linear.1} parent=1 // pred_check
      _
    $region15: #{split_linear.1} parent=1 // pred_check_branch
      %38 = sbr.rel (0) target = $region17
    $region16: #{split_linear.1} parent=1 // pred_region
      %39 = dma.done [#allocation5], 1024
    $region17: #{split_linear.1} parent=1 // pred_fallthru
      _
    %s40 = sld [smem:[#allocation3]]
    %p41 = scmp.lt.s32.totalorder %s40, 1
    %s42 = scalar_select %p41, %s40, 1
    %s43 = scalar_lea.vmem %s3, %s42
    %s44 = sld [smem:[#allocation3]]
    %s45 = sld [smem:[#allocation3]]
    %p46 = scmp.lt.s32.totalorder %s45, 1
    %s47 = scalar_select %p46, %s45, 1
    %s48 = scalar_lea.vmem %s3, %s47
    %s49 = sld [smem:[#allocation3]]
    %p51 = scmp.eq.s32.totalorder 0, 0
    // Predicated region
    $region18: #{split_linear.1} parent=1 // pred_check
      %p52 = pneg %p51
    $region19: #{split_linear.1} parent=1 // pred_check_branch
      %54 = sbr.rel (%p52) target = $region21
    $region20: #{split_linear.1} parent=1 // pred_region
      %55 = vst [vmem:[#allocation7] sm:$0xff] 0.0
    $region21: #{split_linear.1} parent=1 // pred_fallthru
      _
    %s56 = smul.u32 0, 128
    %s57 = sshra.s32 %s56, 7
    %s58 = sand.u32 %s56, 127
    %s59 = smul.addr %s57, 4
    %s60 = scalar_lea.vmem %s1, %s59
    %v61 = vld [vmem:[%s60] sm:$0xf]
    %v62 = vld [vmem:[#allocation7] sm:$0xff]
    %v63 = vld [vmem:[#allocation4] sm:$0xf]
    %v64 = vld [vmem:[#allocation4 + $0x4] sm:$0xf]
    %v65 = vld [vmem:[#allocation4 + $0x8] sm:$0xf]
    %v66 = vld [vmem:[#allocation4 + $0xc] sm:$0xf]
    %v67 = vld [vmem:[#allocation4 + $0x10] sm:$0xf]
    %v68 = vld [vmem:[#allocation4 + $0x14] sm:$0xf]
    %v69 = vld [vmem:[#allocation4 + $0x18] sm:$0xf]
    %v70 = vld [vmem:[#allocation4 + $0x1c] sm:$0xf]
    %v71 = vld [vmem:[#allocation4 + $0x20] sm:$0xf]
    %v72 = vld [vmem:[#allocation4 + $0x24] sm:$0xf]
    %v73 = vld [vmem:[#allocation4 + $0x28] sm:$0xf]
    %v74 = vld [vmem:[#allocation4 + $0x2c] sm:$0xf]
    %v75 = vld [vmem:[#allocation4 + $0x30] sm:$0xf]
    %v76 = vld [vmem:[#allocation4 + $0x34] sm:$0xf]
    %v77 = vld [vmem:[#allocation4 + $0x38] sm:$0xf]
    %v78 = vld [vmem:[#allocation4 + $0x3c] sm:$0xf]
    %v95 = vunpack.c.l.b16 %v63
    %v96 = vunpack.c.l.b16 %v64
    %v97 = vunpack.c.l.b16 %v65
    %v98 = vunpack.c.l.b16 %v66
    %v99 = vunpack.c.l.b16 %v67
    %v100 = vunpack.c.l.b16 %v68
    %v101 = vunpack.c.l.b16 %v69
    %v102 = vunpack.c.l.b16 %v70
    %v103 = vunpack.c.l.b16 %v71
    %v104 = vunpack.c.l.b16 %v72
    %v105 = vunpack.c.l.b16 %v73
    %v106 = vunpack.c.l.b16 %v74
    %v107 = vunpack.c.l.b16 %v75
    %v108 = vunpack.c.l.b16 %v76
    %v109 = vunpack.c.l.b16 %v77
    %v110 = vunpack.c.l.b16 %v78
    %v111 = vpack.c.b16 %v96, %v95
    %v112 = vpack.c.b16 %v98, %v97
    %v113 = vpack.c.b16 %v100, %v99
    %v114 = vpack.c.b16 %v102, %v101
    %v115 = vpack.c.b16 %v104, %v103
    %v116 = vpack.c.b16 %v106, %v105
    %v117 = vpack.c.b16 %v108, %v107
    %v118 = vpack.c.b16 %v110, %v109
    %127 = vmatprep.subr.bf16.mxu0 0
    %128 = vmatpush1.bf16.msra.mxu0 %v111
    %129 = vmatprep.subr.bf16.mxu0 0
    %130 = vmatpush1.bf16.msra.mxu0 %v112
    %131 = vmatprep.subr.bf16.mxu0 0
    %132 = vmatpush1.bf16.msra.mxu0 %v113
    %133 = vmatprep.subr.bf16.mxu0 0
    %134 = vmatpush1.bf16.msra.mxu0 %v114
    %135 = vmatprep.subr.bf16.mxu0 0
    %136 = vmatpush1.bf16.msra.mxu0 %v115
    %137 = vmatprep.subr.bf16.mxu0 0
    %138 = vmatpush1.bf16.msra.mxu0 %v116
    %139 = vmatprep.subr.bf16.mxu0 0
    %140 = vmatpush1.bf16.msra.mxu0 %v117
    %141 = vmatprep.subr.bf16.mxu0 0
    %142 = vmatpush1.bf16.msra.mxu0 %v118
    %143 = vmatprep.subr.bf16.mxu0 0
    %144 = vmatpush1.bf16.msra.mxu0 0
    %145 = vmatprep.subr.bf16.mxu0 0
    %146 = vmatpush1.bf16.msra.mxu0 0
    %147 = vmatprep.subr.bf16.mxu0 0
    %148 = vmatpush1.bf16.msra.mxu0 0
    %149 = vmatprep.subr.bf16.mxu0 0
    %150 = vmatpush1.bf16.msra.mxu0 0
    %151 = vmatprep.subr.bf16.mxu0 0
    %152 = vmatpush1.bf16.msra.mxu0 0
    %153 = vmatprep.subr.bf16.mxu0 0
    %154 = vmatpush1.bf16.msra.mxu0 0
    %155 = vmatprep.subr.bf16.mxu0 0
    %156 = vmatpush1.bf16.msra.mxu0 0
    %157 = vmatprep.subr.bf16.mxu0 0
    %158 = vmatpush1.bf16.msra.mxu0 0
    %159 = vmatprep.mubr.bf16.mxu0 0
    %160 = vmatmul.mubr.bf16.gmra.mrb[0].mxu0 %v61
    %v161 = vpop.f32.mrb[0].mxu0
    %v162 = vadd.f32 0.0, %v161
    %v163 = vpop.f32.mrb[0].mxu0
    %v164 = vpop.f32.mrb[0].mxu0
    %v165 = vpop.f32.mrb[0].mxu0
    %166 = vdwg.mxu0
    %v167 = vadd.f32 %v62, %v162
    %168 = vst [vmem:[#allocation7] sm:$0xff] %v167
    // Predicated region
    $region22: #{split_linear.1} parent=1 // pred_check
      %p169 = pneg %p51
    $region23: #{split_linear.1} parent=1 // pred_check_branch
      %171 = sbr.rel (%p169) target = $region25
    $region24: #{split_linear.1} parent=1 // pred_region
      %v172 = vld [vmem:[#allocation7] sm:$0xff]
      %v173 = vld [vmem:[%s48] sm:$0x1]
      %v175 = vlaneseq
      %v176 = vshrl.u32 %v175, 7
      %v177 = vsub.s32 0, %v176
      %v178 = vrot.slane %v173, %v177
      %v180 = vadd.f32 %v172, %v178
      %181 = vst [vmem:[#allocation7] sm:$0xff] %v180
    $region25: #{split_linear.1} parent=1 // pred_fallthru
      _
    // Predicated region
    $region26: #{split_linear.1} parent=1 // pred_check
      _
    $region27: #{split_linear.1} parent=1 // pred_check_branch
      %183 = sbr.rel (0) target = $region29
    $region28: #{split_linear.1} parent=1 // pred_region
      %s185 = ssub.s32 128, 128
      %186 = vsyncadd [#allocation6], %s185
      %s188 = sshll.u32 [#allocation7], 4
      %s189 = int_to_ptr.vmem [resolvable:$true] %s188
      %191 = dma.vmem_to_hbm [thread:$0]  %s189, 128, %s4, [#allocation6]
    $region29: #{split_linear.1} parent=1 // pred_fallthru
      _
    // Predicated region
    $region30: #{split_linear.1} parent=1 // pred_check
      _
    $region31: #{split_linear.1} parent=1 // pred_check_branch
      %193 = sbr.rel (0) target = $region33
    $region32: #{split_linear.1} parent=1 // pred_region
      %194 = dma.done [#allocation6], 128
    $region33: #{split_linear.1} parent=1 // pred_fallthru
      _
    %195 = vsyncpa [#allocation5], 1
    %196 = vsyncpa [#allocation6], 1

</llo_original>
